<compile_context>
chip_gen: v6e
topology: v6e:2x2x1
jax: 0.10.0
libtpu: 0.0.40
codegen_flags: <defaults>
</compile_context>

<pallas_src>
import jax
import jax.numpy as jnp
from jax.experimental import pallas as pl
from jax.experimental.pallas import tpu as pltpu

D_IN, D_HID, D_OUT = 5, 3, 2


def _softplus(x):
    # Numerically stable softplus using only basic VPU/EUP ops.
    return jnp.maximum(x, 0.0) + jnp.log(1.0 + jnp.exp(-jnp.abs(x)))


def mlp_kernel(w1_ref, b1_ref, w2_ref, b2_ref, xt_ref, ot_ref):
    # xt_ref: [D_IN, block_n]  -- features in sublanes, batch in lanes (lane-dense)
    # ot_ref: [D_OUT, block_n]
    bn = xt_ref.shape[1]
    xt = xt_ref[...]                              # single full-tile load
    zeros = jnp.zeros((1, bn), jnp.float32)       # hoisted broadcast (reused below)

    # --- Linear(5,3) + Dropout(eval: identity) + ReLU, fully unrolled on the VPU ---
    h = []
    for j in range(D_HID):
        acc = zeros + b1_ref[j]                   # bias folded in as a scalar broadcast
        for k in range(D_IN):
            acc = acc + xt[k:k + 1, :] * w1_ref[k * D_HID + j]
        h.append(jnp.maximum(acc, 0.0))

    # --- Linear(3,2), fully unrolled on the VPU ---
    logits = []
    for j in range(D_OUT):
        acc = zeros + b2_ref[j]
        for k in range(D_HID):
            acc = acc + h[k] * w2_ref[k * D_OUT + j]
        logits.append(acc)

    # --- LogSoftmax over the 2 classes (closed form, no cross-lane reductions) ---
    d = logits[1] - logits[0]
    ot_ref[0:1, :] = -_softplus(d)
    ot_ref[1:2, :] = -_softplus(-d)


def mlp_forward(x, w1, b1, w2, b2, *, block_n=None):
    """x: [N, 5] f32; w1: [5, 3]; b1: [3]; w2: [3, 2]; b2: [2]  ->  [N, 2] log-probs."""
    n = x.shape[0]
    if block_n is None:
        # Lane-dense block: multiple of 128, capped at 512 (v7x-safe, double-buffer friendly).
        block_n = min(512, ((n + 127) // 128) * 128)
    n_pad = pl.cdiv(n, block_n) * block_n

    # Batch -> lane axis: pad and transpose in the wrapper (layout plumbing, not compute).
    xt = jnp.zeros((D_IN, n_pad), jnp.float32).at[:, :n].set(x.astype(jnp.float32).T)

    smem = pl.BlockSpec(memory_space=pltpu.MemorySpace.SMEM)
    out_t = pl.pallas_call(
        mlp_kernel,
        out_shape=jax.ShapeDtypeStruct((D_OUT, n_pad), jnp.float32),
        grid=(n_pad // block_n,),
        in_specs=[
            smem,  # w1 (flattened [5*3])
            smem,  # b1 ([3])
            smem,  # w2 (flattened [3*2])
            smem,  # b2 ([2])
            pl.BlockSpec((D_IN, block_n), lambda i: (0, i)),   # x^T, tiled over lanes
        ],
        out_specs=pl.BlockSpec((D_OUT, block_n), lambda i: (0, i)),
        compiler_params=pltpu.CompilerParams(
            dimension_semantics=("parallel",),                 # megacore / v7x 2-TC sharding
        ),
    )(
        w1.astype(jnp.float32).reshape(-1),
        b1.astype(jnp.float32).reshape(-1),
        w2.astype(jnp.float32).reshape(-1),
        b2.astype(jnp.float32).reshape(-1),
        xt,
    )
    return out_t[:, :n].T


def init_linear_params(key, fan_in, fan_out):
    """Deterministic init mimicking PyTorch nn.Linear (uniform +/- 1/sqrt(fan_in))."""
    kw, kb = jax.random.split(key)
    bound = 1.0 / jnp.sqrt(fan_in)
    # Stored already transposed vs. nn.Linear: [fan_in, fan_out]
    w = jax.random.uniform(kw, (fan_in, fan_out), jnp.float32, -bound, bound)
    b = jax.random.uniform(kb, (fan_out,), jnp.float32, -bound, bound)
    return w, b


if __name__ == "__main__":
    dims = [5, 3, 2]
    batch = 8

    key = jax.random.PRNGKey(0)
    kx, k1, k2 = jax.random.split(key, 3)

    x = jax.random.normal(kx, (batch, dims[0]), jnp.float32)
    w1, b1 = init_linear_params(k1, dims[0], dims[1])
    w2, b2 = init_linear_params(k2, dims[1], dims[2])

    out = mlp_forward(x, w1, b1, w2, b2)
    jax.block_until_ready(out)

    # Reference check in plain JAX (eval-mode dropout = identity).
    h_ref = jnp.maximum(x @ w1 + b1, 0.0)
    logits_ref = h_ref @ w2 + b2
    ref = jax.nn.log_softmax(logits_ref, axis=1)
    assert jnp.allclose(out, ref, atol=1e-5), "mismatch vs reference"

    print("KERNEL_OK")
</pallas_src>

<mosaic_0001>
module attributes {stable_mosaic.version = 11 : i64} {
  func.func @mlp_kernel(%arg0: i32, %arg1: memref<15xf32, #tpu.memory_space<smem>>, %arg2: memref<3xf32, #tpu.memory_space<smem>>, %arg3: memref<6xf32, #tpu.memory_space<smem>>, %arg4: memref<2xf32, #tpu.memory_space<smem>>, %arg5: memref<5x128xf32, #tpu.memory_space<vmem>>, %arg6: memref<2x128xf32, #tpu.memory_space<vmem>>) attributes {dimension_semantics = [#tpu.dimension_semantics<parallel>], iteration_bounds = array<i64: 1>, scalar_prefetch = 0 : i64, scratch_operands = 0 : i64, tpu.core_type = #tpu.core_type<tc>, window_params = [{transform_indices = @transform_0, window_bounds = array<i64: 15>}, {transform_indices = @transform_1, window_bounds = array<i64: 3>}, {transform_indices = @transform_2, window_bounds = array<i64: 6>}, {transform_indices = @transform_3, window_bounds = array<i64: 2>}, {transform_indices = @transform_4, window_bounds = array<i64: 5, 128>}, {transform_indices = @transform_5, window_bounds = array<i64: 2, 128>}]} {
    %c0 = arith.constant 0 : index
    %c0_0 = arith.constant 0 : index
    %0 = vector.load %arg5[%c0, %c0_0] : memref<5x128xf32, #tpu.memory_space<vmem>>, vector<5x128xf32>
    %cst = arith.constant 0.000000e+00 : f32
    %1 = vector.broadcast %cst : f32 to vector<1x128xf32>
    %c0_1 = arith.constant 0 : index
    %2 = memref.load %arg2[%c0_1] : memref<3xf32, #tpu.memory_space<smem>>
    %3 = vector.broadcast %2 : f32 to vector<1x128xf32>
    %4 = arith.addf %1, %3 : vector<1x128xf32>
    %5 = vector.extract_strided_slice %0 {offsets = [0, 0], sizes = [1, 128], strides = [1, 1]} : vector<5x128xf32> to vector<1x128xf32>
    %c0_2 = arith.constant 0 : index
    %6 = memref.load %arg1[%c0_2] : memref<15xf32, #tpu.memory_space<smem>>
    %7 = vector.broadcast %6 : f32 to vector<1x128xf32>
    %8 = arith.mulf %5, %7 : vector<1x128xf32>
    %9 = arith.addf %4, %8 : vector<1x128xf32>
    %10 = vector.extract_strided_slice %0 {offsets = [1, 0], sizes = [1, 128], strides = [1, 1]} : vector<5x128xf32> to vector<1x128xf32>
    %c3 = arith.constant 3 : index
    %11 = memref.load %arg1[%c3] : memref<15xf32, #tpu.memory_space<smem>>
    %12 = vector.broadcast %11 : f32 to vector<1x128xf32>
    %13 = arith.mulf %10, %12 : vector<1x128xf32>
    %14 = arith.addf %9, %13 : vector<1x128xf32>
    %15 = vector.extract_strided_slice %0 {offsets = [2, 0], sizes = [1, 128], strides = [1, 1]} : vector<5x128xf32> to vector<1x128xf32>
    %c6 = arith.constant 6 : index
    %16 = memref.load %arg1[%c6] : memref<15xf32, #tpu.memory_space<smem>>
    %17 = vector.broadcast %16 : f32 to vector<1x128xf32>
    %18 = arith.mulf %15, %17 : vector<1x128xf32>
    %19 = arith.addf %14, %18 : vector<1x128xf32>
    %20 = vector.extract_strided_slice %0 {offsets = [3, 0], sizes = [1, 128], strides = [1, 1]} : vector<5x128xf32> to vector<1x128xf32>
    %c9 = arith.constant 9 : index
    %21 = memref.load %arg1[%c9] : memref<15xf32, #tpu.memory_space<smem>>
    %22 = vector.broadcast %21 : f32 to vector<1x128xf32>
    %23 = arith.mulf %20, %22 : vector<1x128xf32>
    %24 = arith.addf %19, %23 : vector<1x128xf32>
    %25 = vector.extract_strided_slice %0 {offsets = [4, 0], sizes = [1, 128], strides = [1, 1]} : vector<5x128xf32> to vector<1x128xf32>
    %c12 = arith.constant 12 : index
    %26 = memref.load %arg1[%c12] : memref<15xf32, #tpu.memory_space<smem>>
    %27 = vector.broadcast %26 : f32 to vector<1x128xf32>
    %28 = arith.mulf %25, %27 : vector<1x128xf32>
    %29 = arith.addf %24, %28 : vector<1x128xf32>
    %cst_3 = arith.constant 0.000000e+00 : f32
    %30 = vector.broadcast %cst_3 : f32 to vector<1x128xf32>
    %31 = arith.maximumf %29, %30 : vector<1x128xf32>
    %c1 = arith.constant 1 : index
    %32 = memref.load %arg2[%c1] : memref<3xf32, #tpu.memory_space<smem>>
    %33 = vector.broadcast %32 : f32 to vector<1x128xf32>
    %34 = arith.addf %1, %33 : vector<1x128xf32>
    %35 = vector.extract_strided_slice %0 {offsets = [0, 0], sizes = [1, 128], strides = [1, 1]} : vector<5x128xf32> to vector<1x128xf32>
    %c1_4 = arith.constant 1 : index
    %36 = memref.load %arg1[%c1_4] : memref<15xf32, #tpu.memory_space<smem>>
    %37 = vector.broadcast %36 : f32 to vector<1x128xf32>
    %38 = arith.mulf %35, %37 : vector<1x128xf32>
    %39 = arith.addf %34, %38 : vector<1x128xf32>
    %40 = vector.extract_strided_slice %0 {offsets = [1, 0], sizes = [1, 128], strides = [1, 1]} : vector<5x128xf32> to vector<1x128xf32>
    %c4 = arith.constant 4 : index
    %41 = memref.load %arg1[%c4] : memref<15xf32, #tpu.memory_space<smem>>
    %42 = vector.broadcast %41 : f32 to vector<1x128xf32>
    %43 = arith.mulf %40, %42 : vector<1x128xf32>
    %44 = arith.addf %39, %43 : vector<1x128xf32>
    %45 = vector.extract_strided_slice %0 {offsets = [2, 0], sizes = [1, 128], strides = [1, 1]} : vector<5x128xf32> to vector<1x128xf32>
    %c7 = arith.constant 7 : index
    %46 = memref.load %arg1[%c7] : memref<15xf32, #tpu.memory_space<smem>>
    %47 = vector.broadcast %46 : f32 to vector<1x128xf32>
    %48 = arith.mulf %45, %47 : vector<1x128xf32>
    %49 = arith.addf %44, %48 : vector<1x128xf32>
    %50 = vector.extract_strided_slice %0 {offsets = [3, 0], sizes = [1, 128], strides = [1, 1]} : vector<5x128xf32> to vector<1x128xf32>
    %c10 = arith.constant 10 : index
    %51 = memref.load %arg1[%c10] : memref<15xf32, #tpu.memory_space<smem>>
    %52 = vector.broadcast %51 : f32 to vector<1x128xf32>
    %53 = arith.mulf %50, %52 : vector<1x128xf32>
    %54 = arith.addf %49, %53 : vector<1x128xf32>
    %55 = vector.extract_strided_slice %0 {offsets = [4, 0], sizes = [1, 128], strides = [1, 1]} : vector<5x128xf32> to vector<1x128xf32>
    %c13 = arith.constant 13 : index
    %56 = memref.load %arg1[%c13] : memref<15xf32, #tpu.memory_space<smem>>
    %57 = vector.broadcast %56 : f32 to vector<1x128xf32>
    %58 = arith.mulf %55, %57 : vector<1x128xf32>
    %59 = arith.addf %54, %58 : vector<1x128xf32>
    %cst_5 = arith.constant 0.000000e+00 : f32
    %60 = vector.broadcast %cst_5 : f32 to vector<1x128xf32>
    %61 = arith.maximumf %59, %60 : vector<1x128xf32>
    %c2 = arith.constant 2 : index
    %62 = memref.load %arg2[%c2] : memref<3xf32, #tpu.memory_space<smem>>
    %63 = vector.broadcast %62 : f32 to vector<1x128xf32>
    %64 = arith.addf %1, %63 : vector<1x128xf32>
    %65 = vector.extract_strided_slice %0 {offsets = [0, 0], sizes = [1, 128], strides = [1, 1]} : vector<5x128xf32> to vector<1x128xf32>
    %c2_6 = arith.constant 2 : index
    %66 = memref.load %arg1[%c2_6] : memref<15xf32, #tpu.memory_space<smem>>
    %67 = vector.broadcast %66 : f32 to vector<1x128xf32>
    %68 = arith.mulf %65, %67 : vector<1x128xf32>
    %69 = arith.addf %64, %68 : vector<1x128xf32>
    %70 = vector.extract_strided_slice %0 {offsets = [1, 0], sizes = [1, 128], strides = [1, 1]} : vector<5x128xf32> to vector<1x128xf32>
    %c5 = arith.constant 5 : index
    %71 = memref.load %arg1[%c5] : memref<15xf32, #tpu.memory_space<smem>>
    %72 = vector.broadcast %71 : f32 to vector<1x128xf32>
    %73 = arith.mulf %70, %72 : vector<1x128xf32>
    %74 = arith.addf %69, %73 : vector<1x128xf32>
    %75 = vector.extract_strided_slice %0 {offsets = [2, 0], sizes = [1, 128], strides = [1, 1]} : vector<5x128xf32> to vector<1x128xf32>
    %c8 = arith.constant 8 : index
    %76 = memref.load %arg1[%c8] : memref<15xf32, #tpu.memory_space<smem>>
    %77 = vector.broadcast %76 : f32 to vector<1x128xf32>
    %78 = arith.mulf %75, %77 : vector<1x128xf32>
    %79 = arith.addf %74, %78 : vector<1x128xf32>
    %80 = vector.extract_strided_slice %0 {offsets = [3, 0], sizes = [1, 128], strides = [1, 1]} : vector<5x128xf32> to vector<1x128xf32>
    %c11 = arith.constant 11 : index
    %81 = memref.load %arg1[%c11] : memref<15xf32, #tpu.memory_space<smem>>
    %82 = vector.broadcast %81 : f32 to vector<1x128xf32>
    %83 = arith.mulf %80, %82 : vector<1x128xf32>
    %84 = arith.addf %79, %83 : vector<1x128xf32>
    %85 = vector.extract_strided_slice %0 {offsets = [4, 0], sizes = [1, 128], strides = [1, 1]} : vector<5x128xf32> to vector<1x128xf32>
    %c14 = arith.constant 14 : index
    %86 = memref.load %arg1[%c14] : memref<15xf32, #tpu.memory_space<smem>>
    %87 = vector.broadcast %86 : f32 to vector<1x128xf32>
    %88 = arith.mulf %85, %87 : vector<1x128xf32>
    %89 = arith.addf %84, %88 : vector<1x128xf32>
    %cst_7 = arith.constant 0.000000e+00 : f32
    %90 = vector.broadcast %cst_7 : f32 to vector<1x128xf32>
    %91 = arith.maximumf %89, %90 : vector<1x128xf32>
    %c0_8 = arith.constant 0 : index
    %92 = memref.load %arg4[%c0_8] : memref<2xf32, #tpu.memory_space<smem>>
    %93 = vector.broadcast %92 : f32 to vector<1x128xf32>
    %94 = arith.addf %1, %93 : vector<1x128xf32>
    %c0_9 = arith.constant 0 : index
    %95 = memref.load %arg3[%c0_9] : memref<6xf32, #tpu.memory_space<smem>>
    %96 = vector.broadcast %95 : f32 to vector<1x128xf32>
    %97 = arith.mulf %31, %96 : vector<1x128xf32>
    %98 = arith.addf %94, %97 : vector<1x128xf32>
    %c2_10 = arith.constant 2 : index
    %99 = memref.load %arg3[%c2_10] : memref<6xf32, #tpu.memory_space<smem>>
    %100 = vector.broadcast %99 : f32 to vector<1x128xf32>
    %101 = arith.mulf %61, %100 : vector<1x128xf32>
    %102 = arith.addf %98, %101 : vector<1x128xf32>
    %c4_11 = arith.constant 4 : index
    %103 = memref.load %arg3[%c4_11] : memref<6xf32, #tpu.memory_space<smem>>
    %104 = vector.broadcast %103 : f32 to vector<1x128xf32>
    %105 = arith.mulf %91, %104 : vector<1x128xf32>
    %106 = arith.addf %102, %105 : vector<1x128xf32>
    %c1_12 = arith.constant 1 : index
    %107 = memref.load %arg4[%c1_12] : memref<2xf32, #tpu.memory_space<smem>>
    %108 = vector.broadcast %107 : f32 to vector<1x128xf32>
    %109 = arith.addf %1, %108 : vector<1x128xf32>
    %c1_13 = arith.constant 1 : index
    %110 = memref.load %arg3[%c1_13] : memref<6xf32, #tpu.memory_space<smem>>
    %111 = vector.broadcast %110 : f32 to vector<1x128xf32>
    %112 = arith.mulf %31, %111 : vector<1x128xf32>
    %113 = arith.addf %109, %112 : vector<1x128xf32>
    %c3_14 = arith.constant 3 : index
    %114 = memref.load %arg3[%c3_14] : memref<6xf32, #tpu.memory_space<smem>>
    %115 = vector.broadcast %114 : f32 to vector<1x128xf32>
    %116 = arith.mulf %61, %115 : vector<1x128xf32>
    %117 = arith.addf %113, %116 : vector<1x128xf32>
    %c5_15 = arith.constant 5 : index
    %118 = memref.load %arg3[%c5_15] : memref<6xf32, #tpu.memory_space<smem>>
    %119 = vector.broadcast %118 : f32 to vector<1x128xf32>
    %120 = arith.mulf %91, %119 : vector<1x128xf32>
    %121 = arith.addf %117, %120 : vector<1x128xf32>
    %122 = arith.subf %121, %106 : vector<1x128xf32>
    %cst_16 = arith.constant 0.000000e+00 : f32
    %123 = vector.broadcast %cst_16 : f32 to vector<1x128xf32>
    %124 = arith.maximumf %122, %123 : vector<1x128xf32>
    %125 = math.absf %122 : vector<1x128xf32>
    %cst_17 = arith.constant 0.000000e+00 : f32
    %126 = vector.broadcast %cst_17 : f32 to vector<1x128xf32>
    %127 = arith.subf %126, %125 : vector<1x128xf32>
    %128 = math.exp %127 : vector<1x128xf32>
    %cst_18 = arith.constant 1.000000e+00 : f32
    %129 = vector.broadcast %cst_18 : f32 to vector<1x128xf32>
    %130 = arith.addf %129, %128 : vector<1x128xf32>
    %131 = math.log %130 : vector<1x128xf32>
    %132 = arith.addf %124, %131 : vector<1x128xf32>
    %cst_19 = arith.constant 0.000000e+00 : f32
    %133 = vector.broadcast %cst_19 : f32 to vector<1x128xf32>
    %134 = arith.subf %133, %132 : vector<1x128xf32>
    %c0_20 = arith.constant 0 : index
    %c0_21 = arith.constant 0 : index
    %135 = vector.load %arg6[%c0_20, %c0_21] : memref<2x128xf32, #tpu.memory_space<vmem>>, vector<1x128xf32>
    tpu.vector_store %arg6[%c0_20, %c0_21], %134 {strides = array<i32>} : memref<2x128xf32, #tpu.memory_space<vmem>>, vector<1x128xf32>,
    %cst_22 = arith.constant 0.000000e+00 : f32
    %136 = vector.broadcast %cst_22 : f32 to vector<1x128xf32>
    %137 = arith.subf %136, %122 : vector<1x128xf32>
    %cst_23 = arith.constant 0.000000e+00 : f32
    %138 = vector.broadcast %cst_23 : f32 to vector<1x128xf32>
    %139 = arith.maximumf %137, %138 : vector<1x128xf32>
    %140 = math.absf %137 : vector<1x128xf32>
    %cst_24 = arith.constant 0.000000e+00 : f32
    %141 = vector.broadcast %cst_24 : f32 to vector<1x128xf32>
    %142 = arith.subf %141, %140 : vector<1x128xf32>
    %143 = math.exp %142 : vector<1x128xf32>
    %cst_25 = arith.constant 1.000000e+00 : f32
    %144 = vector.broadcast %cst_25 : f32 to vector<1x128xf32>
    %145 = arith.addf %144, %143 : vector<1x128xf32>
    %146 = math.log %145 : vector<1x128xf32>
    %147 = arith.addf %139, %146 : vector<1x128xf32>
    %cst_26 = arith.constant 0.000000e+00 : f32
    %148 = vector.broadcast %cst_26 : f32 to vector<1x128xf32>
    %149 = arith.subf %148, %147 : vector<1x128xf32>
    %c1_27 = arith.constant 1 : index
    %c0_28 = arith.constant 0 : index
    %150 = vector.load %arg6[%c1_27, %c0_28] : memref<2x128xf32, #tpu.memory_space<vmem>>, vector<1x128xf32>
    tpu.vector_store %arg6[%c1_27, %c0_28], %149 {strides = array<i32>} : memref<2x128xf32, #tpu.memory_space<vmem>>, vector<1x128xf32>,
    return
  }
  func.func @transform_0(%arg0: i32) -> i32 {
    %c0_i32 = arith.constant 0 : i32
    %c0_i32_0 = arith.constant 0 : i32
    return %c0_i32 : i32
  }
  func.func @transform_1(%arg0: i32) -> i32 {
    %c0_i32 = arith.constant 0 : i32
    %c0_i32_0 = arith.constant 0 : i32
    return %c0_i32 : i32
  }
  func.func @transform_2(%arg0: i32) -> i32 {
    %c0_i32 = arith.constant 0 : i32
    %c0_i32_0 = arith.constant 0 : i32
    return %c0_i32 : i32
  }
  func.func @transform_3(%arg0: i32) -> i32 {
    %c0_i32 = arith.constant 0 : i32
    %c0_i32_0 = arith.constant 0 : i32
    return %c0_i32 : i32
  }
  func.func @transform_4(%arg0: i32) -> (i32, i32) {
    %c0_i32 = arith.constant 0 : i32
    %c0_i32_0 = arith.constant 0 : i32
    return %c0_i32, %arg0 : i32, i32
  }
  func.func @transform_5(%arg0: i32) -> (i32, i32) {
    %c0_i32 = arith.constant 0 : i32
    %c0_i32_0 = arith.constant 0 : i32
    return %c0_i32, %arg0 : i32, i32
  }
}

</mosaic_0001>

<llo_original>
// kernel: tpu_custom_call.1
$region0: #{tpu_custom_call.1}
  #allocation0 [shape = 'u32[]', space=smem, size = 0x4, offset = 0x4, fixed_abs, tag = 'smem constant byte address 0x4 - core index']
  #allocation1 [shape = 'u32[144,128]{1,0:T(1,128)}', space=vmem, size = 0x12000, scoped, tag = 'internal scratch']
  %s0 = inlined_call_operand.hbm [shape: f32[15], index: 0, kind: input, shape index: {}]
  %s1 = inlined_call_operand.vmem [shape: f32[3], index: 1, kind: input, shape index: {}]
  %s2 = inlined_call_operand.vmem [shape: f32[6], index: 2, kind: input, shape index: {}]
  %s3 = inlined_call_operand.vmem [shape: f32[2], index: 3, kind: input, shape index: {}]
  %s4 = inlined_call_operand.hbm [shape: f32[5,128], index: 4, kind: input, shape index: {}]
  %s5 = inlined_call_operand.hbm [shape: f32[2,128], index: 5, kind: output, shape index: {}]
  %s6 = sld [smem:[#allocation0]]
  $region50: #{tpu_custom_call.1} parent=0
    _
  %s8 = ssub.s32 1, %s6
  %s9 = scalar_select 0, %s8, %s6
  $region1: #{tpu_custom_call.1} parent=0
    #allocation2 [shape = 'u8[512]{0}', space=smem, size = 0x200, scoped, tag = 'input window, operand 0, single buffered']
    #allocation3 [shape = 's32[1]{0}', space=sflag, size = 0x4, scoped, tag = 'scoped memory for tpu_custom_call.1']
    #allocation4 [shape = 's32[1]{0}', space=sflag, size = 0x4, scoped, tag = 'scoped memory for tpu_custom_call.1']
    #allocation5 [shape = 's32[1]{0}', space=sflag, size = 0x4, scoped, tag = 'scoped memory for tpu_custom_call.1']
    #allocation6 [shape = 's32[1]{0}', space=sflag, size = 0x4, scoped, tag = 'scoped memory for tpu_custom_call.1']
    #allocation7 [shape = 'u8[512]{0}', space=smem, size = 0x200, scoped, tag = 'input window, operand 1, single buffered']
    #allocation8 [shape = 'u8[512]{0}', space=smem, size = 0x200, scoped, tag = 'input window, operand 2, single buffered']
    #allocation9 [shape = 's32[1]{0}', space=sflag, size = 0x4, scoped, tag = 'scoped memory for tpu_custom_call.1']
    #allocation10 [shape = 'u8[512]{0}', space=smem, size = 0x200, scoped, tag = 'input window, operand 3, single buffered']
    #allocation11 [shape = 'u8[4096]{0}', space=vmem, size = 0x1000, scoped, tag = 'input window, operand 4, single buffered']
    #allocation12 [shape = 'u8[1024]{0}', space=vmem, size = 0x400, scoped, tag = 'output window, operand 0, single buffered']
    %10 = vsyncpa [#allocation5], 0
    %11 = vsyncpa [#allocation6], 0
    %12 = vsyncpa [#allocation9], 0
    %13 = vsyncpa [#allocation3], 0
    %14 = vsyncpa [#allocation4], 0
    // Predicated region
    $region2: #{tpu_custom_call.1} parent=1 // pred_check
      _
    $region3: #{tpu_custom_call.1} parent=1 // pred_check_branch
      %16 = sbr.rel (0) target = $region5
    $region4: #{tpu_custom_call.1} parent=1 // pred_region
      %s18 = ssub.s32 16, 16
      %19 = vsyncadd [#allocation5], %s18
      %22 = dma.hbm_to_smem %s0, 16, [#allocation2], [#allocation5]
    $region5: #{tpu_custom_call.1} parent=1 // pred_fallthru
      _
    // Predicated region
    $region6: #{tpu_custom_call.1} parent=1 // pred_check
      _
    $region7: #{tpu_custom_call.1} parent=1 // pred_check_branch
      %24 = sbr.rel (0) target = $region9
    $region8: #{tpu_custom_call.1} parent=1 // pred_region
      %s26 = ssub.s32 16, 16
      %27 = vsyncadd [#allocation6], %s26
      %s29 = sshll.u32 %s1, 4
      %s30 = int_to_ptr.vmem [resolvable:$true] %s29
      %32 = dma.vmem_to_smem %s30, 16, [#allocation7], [#allocation6]
    $region9: #{tpu_custom_call.1} parent=1 // pred_fallthru
      _
    // Predicated region
    $region10: #{tpu_custom_call.1} parent=1 // pred_check
      _
    $region11: #{tpu_custom_call.1} parent=1 // pred_check_branch
      %34 = sbr.rel (0) target = $region13
    $region12: #{tpu_custom_call.1} parent=1 // pred_region
      %s36 = ssub.s32 16, 16
      %37 = vsyncadd [#allocation9], %s36
      %s39 = sshll.u32 %s2, 4
      %s40 = int_to_ptr.vmem [resolvable:$true] %s39
      %42 = dma.vmem_to_smem %s40, 16, [#allocation8], [#allocation9]
    $region13: #{tpu_custom_call.1} parent=1 // pred_fallthru
      _
    // Predicated region
    $region14: #{tpu_custom_call.1} parent=1 // pred_check
      _
    $region15: #{tpu_custom_call.1} parent=1 // pred_check_branch
      %44 = sbr.rel (0) target = $region17
    $region16: #{tpu_custom_call.1} parent=1 // pred_region
      %s46 = ssub.s32 16, 16
      %47 = vsyncadd [#allocation9], %s46
      %s49 = sshll.u32 %s3, 4
      %s50 = int_to_ptr.vmem [resolvable:$true] %s49
      %52 = dma.vmem_to_smem %s50, 16, [#allocation10], [#allocation9]
    $region17: #{tpu_custom_call.1} parent=1 // pred_fallthru
      _
    // Predicated region
    $region18: #{tpu_custom_call.1} parent=1 // pred_check
      _
    $region19: #{tpu_custom_call.1} parent=1 // pred_check_branch
      %54 = sbr.rel (0) target = $region21
    $region20: #{tpu_custom_call.1} parent=1 // pred_region
      %s56 = ssub.s32 128, 128
      %57 = vsyncadd [#allocation3], %s56
      %s59 = sshll.u32 [#allocation11], 4
      %s60 = int_to_ptr.vmem [resolvable:$true] %s59
      %62 = dma.hbm_to_vmem [thread:$0]  %s4, 128, %s60, [#allocation3]
    $region21: #{tpu_custom_call.1} parent=1 // pred_fallthru
      _
    // Predicated region
    $region22: #{tpu_custom_call.1} parent=1 // pred_check
      _
    $region23: #{tpu_custom_call.1} parent=1 // pred_check_branch
      %64 = sbr.rel (0) target = $region25
    $region24: #{tpu_custom_call.1} parent=1 // pred_region
      %65 = dma.done [#allocation5], 16
    $region25: #{tpu_custom_call.1} parent=1 // pred_fallthru
      _
    // Predicated region
    $region26: #{tpu_custom_call.1} parent=1 // pred_check
      _
    $region27: #{tpu_custom_call.1} parent=1 // pred_check_branch
      %67 = sbr.rel (0) target = $region29
    $region28: #{tpu_custom_call.1} parent=1 // pred_region
      %68 = dma.done [#allocation6], 16
    $region29: #{tpu_custom_call.1} parent=1 // pred_fallthru
      _
    // Predicated region
    $region30: #{tpu_custom_call.1} parent=1 // pred_check
      _
    $region31: #{tpu_custom_call.1} parent=1 // pred_check_branch
      %70 = sbr.rel (0) target = $region33
    $region32: #{tpu_custom_call.1} parent=1 // pred_region
      %71 = dma.done [#allocation9], 16
    $region33: #{tpu_custom_call.1} parent=1 // pred_fallthru
      _
    // Predicated region
    $region34: #{tpu_custom_call.1} parent=1 // pred_check
      _
    $region35: #{tpu_custom_call.1} parent=1 // pred_check_branch
      %73 = sbr.rel (0) target = $region37
    $region36: #{tpu_custom_call.1} parent=1 // pred_region
      %74 = dma.done [#allocation9], 16
    $region37: #{tpu_custom_call.1} parent=1 // pred_fallthru
      _
    // Predicated region
    $region38: #{tpu_custom_call.1} parent=1 // pred_check
      _
    $region39: #{tpu_custom_call.1} parent=1 // pred_check_branch
      %76 = sbr.rel (0) target = $region41
    $region40: #{tpu_custom_call.1} parent=1 // pred_region
      %77 = dma.done [#allocation3], 128
    $region41: #{tpu_custom_call.1} parent=1 // pred_fallthru
      _
    %78 = sfence
    %v79 = vld [vmem:[#allocation11] sm:$0x1f]
    %s80 = sld [smem:[#allocation7]]
    %v81 = vstv %s80
    %v82 = vadd.f32 %v81, 0.0
    %s83 = sld [smem:[#allocation2]]
    %v84 = vstv %s83
    %v85 = vmul.f32 %v79, %v84
    %v86 = vadd.f32 %v82, %v85
    %s87 = sld [smem:[#allocation2 + $0x3]]
    %v88 = vstv %s87
    %v89 = vmul.f32 %v79, %v88
    %v91 = vrot.slane %v89, 1
    %v93 = vadd.f32 %v86, %v91
    %s94 = sld [smem:[#allocation2 + $0x6]]
    %v95 = vstv %s94
    %v96 = vmul.f32 %v79, %v95
    %v98 = vrot.slane %v96, 2
    %v100 = vadd.f32 %v93, %v98
    %s101 = sld [smem:[#allocation2 + $0x9]]
    %v102 = vstv %s101
    %v103 = vmul.f32 %v79, %v102
    %v105 = vrot.slane %v103, 3
    %v107 = vadd.f32 %v100, %v105
    %s108 = sld [smem:[#allocation2 + $0xc]]
    %v109 = vstv %s108
    %v110 = vmul.f32 %v79, %v109
    %v112 = vrot.slane %v110, 4
    %v114 = vadd.f32 %v107, %v112
    %v115 = vmax.f32 %v114, 0.0
    %s116 = sld [smem:[#allocation7 + $0x1]]
    %v117 = vstv %s116
    %v118 = vadd.f32 %v117, 0.0
    %s119 = sld [smem:[#allocation2 + $0x1]]
    %v120 = vstv %s119
    %v121 = vmul.f32 %v79, %v120
    %v122 = vadd.f32 %v118, %v121
    %s123 = sld [smem:[#allocation2 + $0x4]]
    %v124 = vstv %s123
    %v125 = vmul.f32 %v79, %v124
    %v127 = vrot.slane %v125, 1
    %v129 = vadd.f32 %v122, %v127
    %s130 = sld [smem:[#allocation2 + $0x7]]
    %v131 = vstv %s130
    %v132 = vmul.f32 %v79, %v131
    %v134 = vrot.slane %v132, 2
    %v136 = vadd.f32 %v129, %v134
    %s137 = sld [smem:[#allocation2 + $0xa]]
    %v138 = vstv %s137
    %v139 = vmul.f32 %v79, %v138
    %v141 = vrot.slane %v139, 3
    %v143 = vadd.f32 %v136, %v141
    %s144 = sld [smem:[#allocation2 + $0xd]]
    %v145 = vstv %s144
    %v146 = vmul.f32 %v79, %v145
    %v148 = vrot.slane %v146, 4
    %v150 = vadd.f32 %v143, %v148
    %v151 = vmax.f32 %v150, 0.0
    %s152 = sld [smem:[#allocation7 + $0x2]]
    %v153 = vstv %s152
    %v154 = vadd.f32 %v153, 0.0
    %s155 = sld [smem:[#allocation2 + $0x2]]
    %v156 = vstv %s155
    %v157 = vmul.f32 %v79, %v156
    %v158 = vadd.f32 %v154, %v157
    %s159 = sld [smem:[#allocation2 + $0x5]]
    %v160 = vstv %s159
    %v161 = vmul.f32 %v79, %v160
    %v163 = vrot.slane %v161, 1
    %v165 = vadd.f32 %v158, %v163
    %s166 = sld [smem:[#allocation2 + $0x8]]
    %v167 = vstv %s166
    %v168 = vmul.f32 %v79, %v167
    %v170 = vrot.slane %v168, 2
    %v172 = vadd.f32 %v165, %v170
    %s173 = sld [smem:[#allocation2 + $0xb]]
    %v174 = vstv %s173
    %v175 = vmul.f32 %v79, %v174
    %v177 = vrot.slane %v175, 3
    %v179 = vadd.f32 %v172, %v177
    %s180 = sld [smem:[#allocation2 + $0xe]]
    %v181 = vstv %s180
    %v182 = vmul.f32 %v79, %v181
    %v184 = vrot.slane %v182, 4
    %v186 = vadd.f32 %v179, %v184
    %v187 = vmax.f32 %v186, 0.0
    %s188 = sld [smem:[#allocation10]]
    %v189 = vstv %s188
    %v190 = vadd.f32 %v189, 0.0
    %s191 = sld [smem:[#allocation8]]
    %v192 = vstv %s191
    %v193 = vmul.f32 %v115, %v192
    %v194 = vadd.f32 %v190, %v193
    %s195 = sld [smem:[#allocation8 + $0x2]]
    %v196 = vstv %s195
    %v197 = vmul.f32 %v151, %v196
    %v198 = vadd.f32 %v194, %v197
    %s199 = sld [smem:[#allocation8 + $0x4]]
    %v200 = vstv %s199
    %v201 = vmul.f32 %v187, %v200
    %v202 = vadd.f32 %v198, %v201
    %s203 = sld [smem:[#allocation10 + $0x1]]
    %v204 = vstv %s203
    %v205 = vadd.f32 %v204, 0.0
    %s206 = sld [smem:[#allocation8 + $0x1]]
    %v207 = vstv %s206
    %v208 = vmul.f32 %v115, %v207
    %v209 = vadd.f32 %v205, %v208
    %s210 = sld [smem:[#allocation8 + $0x3]]
    %v211 = vstv %s210
    %v212 = vmul.f32 %v151, %v211
    %v213 = vadd.f32 %v209, %v212
    %s214 = sld [smem:[#allocation8 + $0x5]]
    %v215 = vstv %s214
    %v216 = vmul.f32 %v187, %v215
    %v217 = vadd.f32 %v213, %v216
    %v218 = vsub.f32 %v217, %v202
    %v219 = vmax.f32 %v218, 0.0
    %v220 = vand.u32 2147483647, %v218
    %v221 = vsub.f32 0.0, %v220
    %v222 = vmul.f32 %v221, 1.442695
    %v223 = vpow.pop %v222
    %v224 = vadd.f32 %v223, 1.0
    %v225 = vlog2.pop %v224
    %v226 = vmul.f32 %v225, 0.6931472
    %v227 = vadd.f32 %v219, %v226
    %v228 = vsub.f32 0.0, %v227
    %229 = vst [vmem:[#allocation12] sm:$0x1] %v228
    %v230 = vsub.f32 0.0, %v218
    %v231 = vmax.f32 %v230, 0.0
    %v232 = vand.u32 2147483647, %v230
    %v233 = vsub.f32 0.0, %v232
    %v234 = vmul.f32 %v233, 1.442695
    %v235 = vpow.pop %v234
    %v236 = vadd.f32 %v235, 1.0
    %v237 = vlog2.pop %v236
    %v238 = vmul.f32 %v237, 0.6931472
    %v239 = vadd.f32 %v231, %v238
    %v240 = vsub.f32 0.0, %v239
    %241 = vst [vmem:[#allocation12 + $0x1] sm:$0x1] %v240
    // Predicated region
    $region42: #{tpu_custom_call.1} parent=1 // pred_check
      _
    $region43: #{tpu_custom_call.1} parent=1 // pred_check_branch
      %243 = sbr.rel (0) target = $region45
    $region44: #{tpu_custom_call.1} parent=1 // pred_region
      %s245 = ssub.s32 32, 32
      %246 = vsyncadd [#allocation4], %s245
      %s248 = sshll.u32 [#allocation12], 4
      %s249 = int_to_ptr.vmem [resolvable:$true] %s248
      %251 = dma.vmem_to_hbm [thread:$0]  %s249, 32, %s5, [#allocation4]
    $region45: #{tpu_custom_call.1} parent=1 // pred_fallthru
      _
    // Predicated region
    $region46: #{tpu_custom_call.1} parent=1 // pred_check
      _
    $region47: #{tpu_custom_call.1} parent=1 // pred_check_branch
      %253 = sbr.rel (0) target = $region49
    $region48: #{tpu_custom_call.1} parent=1 // pred_region
      %254 = dma.done [#allocation4], 32
    $region49: #{tpu_custom_call.1} parent=1 // pred_fallthru
      _
    %255 = vsyncpa [#allocation3], 1
    %256 = vsyncpa [#allocation4], 1
    %257 = vsyncpa [#allocation5], 1
    %258 = vsyncpa [#allocation6], 1
    %259 = vsyncpa [#allocation9], 1

</llo_original>
